<compile_context>
chip_gen: v6e
topology: v6e:2x2x1
jax: 0.10.0
libtpu: 0.0.40
codegen_flags: <defaults>
</compile_context>

<pallas_src>
import functools

import jax
import jax.numpy as jnp
from jax.experimental import pallas as pl
from jax.experimental.pallas import tpu as pltpu

_LANE = 128
_SUBLANE = 8
_BLOCK_BYTES = 4 * 1024 * 1024  # per-block VMEM budget (review: raised from 2 MiB)


def _pos_enc_eval_kernel(x_ref, enc_ref, o_ref):
    # x_ref / o_ref: (TB, TL) lane-dense block; enc_ref: (1, TL) resident slab.
    o_ref[...] = (x_ref[...] + enc_ref[...]).astype(o_ref.dtype)


def _pos_enc_train_kernel(x_ref, enc_ref, keep_ref, o_ref, *, scale):
    # Inverted dropout fused with the add; math stays in the input dtype.
    out = (x_ref[...] + enc_ref[...]) * keep_ref[...]
    o_ref[...] = (out * jnp.asarray(scale, out.dtype)).astype(o_ref.dtype)


def _choose_blocks(n_rows, n_cols, itemsize):
    """Pick (block_rows, block_cols) for the flattened (N, S*D) view."""
    budget = max(_BLOCK_BYTES // itemsize, _LANE)        # elements per block
    sub = max(_SUBLANE, 32 // itemsize)                  # dtype-aware sublane tile

    # Row (sublane) block: multiple of the packed sublane tile, or the whole axis.
    if n_rows <= sub:
        tb = n_rows
    else:
        tb = pl.cdiv(n_rows, 8)                          # >=8 steps -> >=4 per v7x core
        tb = min(tb, max(sub, budget // n_cols))         # respect the VMEM budget
        tb = max(sub, (tb // sub) * sub)

    # Lane block: whole row if it fits the remaining budget, else a 128-multiple.
    if n_cols * tb <= budget:
        tl = n_cols
    else:
        tl = max(_LANE, (budget // tb // _LANE) * _LANE)
        tl = min(tl, n_cols)
    return tb, tl


def positional_encoding(x, enc_table, *, p=0.1, training=False, rng_key=None,
                        donate_x=False):
    """x: (N, S, D) float array; enc_table: (max_len, D) embedding weights."""
    N, S, D = x.shape
    L = S * D
    x2 = x.reshape(N, L)                                  # lane-dense view
    enc = enc_table[:S].astype(x.dtype).reshape(1, L)     # encoding(arange(S)), cast once

    tb, tl = _choose_blocks(N, L, jnp.dtype(x.dtype).itemsize)
    # Grid: column (lane) axis OUTER, row (batch) axis INNER, so the encoding
    # block index (0, c) only changes once per column block and the slab stays
    # VMEM-resident across all batch blocks (no per-step re-DMA).
    grid = (pl.cdiv(L, tl), pl.cdiv(N, tb))

    x_spec = pl.BlockSpec((tb, tl), lambda c, r: (r, c))
    enc_spec = pl.BlockSpec((1, tl), lambda c, r: (0, c))
    out_spec = pl.BlockSpec((tb, tl), lambda c, r: (r, c))

    use_dropout = training and p > 0.0
    if use_dropout:
        if rng_key is None:
            rng_key = jax.random.PRNGKey(0)
        keep = jax.random.bernoulli(rng_key, 1.0 - p, (N, L)).astype(x.dtype)
        kernel = functools.partial(_pos_enc_train_kernel, scale=1.0 / (1.0 - p))
        operands = (x2, enc, keep)
        in_specs = [x_spec, enc_spec, x_spec]
    else:
        kernel = _pos_enc_eval_kernel
        operands = (x2, enc)
        in_specs = [x_spec, enc_spec]

    out2 = pl.pallas_call(
        kernel,
        out_shape=jax.ShapeDtypeStruct((N, L), x.dtype),
        grid_spec=pl.GridSpec(
            grid=grid,
            in_specs=in_specs,
            out_specs=out_spec,
        ),
        compiler_params=pltpu.CompilerParams(
            dimension_semantics=("parallel", "parallel"),
            vmem_limit_bytes=32 * 1024 * 1024,
        ),
        input_output_aliases=({0: 0} if donate_x else {}),
    )(*operands)
    return out2.reshape(N, S, D)


if __name__ == "__main__":
    # Small shapes consistent with the module: batch=2, seq=8, embed_dim=32.
    N, S, D = 2, 8, 32
    MAX_LEN = 64  # stand-in for max_len=5000 at synthetic scale

    key = jax.random.PRNGKey(0)
    kx, kw, kd = jax.random.split(key, 3)
    x = jax.random.normal(kx, (N, S, D), dtype=jnp.float32)
    # nn.Embedding default init: N(0, 1)
    enc_table = jax.random.normal(kw, (MAX_LEN, D), dtype=jnp.float32)

    ref = x + enc_table[:S][None, :, :]

    # Eval mode: dropout is the identity (nn.Dropout under model.eval()).
    out = positional_encoding(x, enc_table, p=0.1, training=False)
    out = jax.block_until_ready(out)
    assert out.shape == (N, S, D)
    assert jnp.allclose(out, ref, atol=1e-6, rtol=1e-6), "eval-mode mismatch"

    # Training mode: inverted dropout (mask generated with jax.random, fused in-kernel).
    p = 0.1
    out_tr = positional_encoding(x, enc_table, p=p, training=True, rng_key=kd)
    out_tr = jax.block_until_ready(out_tr)
    assert out_tr.shape == (N, S, D)
    kept = out_tr != 0.0
    assert jnp.allclose(out_tr[kept], (ref / (1.0 - p))[kept],
                        atol=1e-5, rtol=1e-5), "training-mode kept values mismatch"
    drop_frac = 1.0 - jnp.mean(kept.astype(jnp.float32))
    assert drop_frac < 0.5, "training-mode dropout rate implausible"

    print("KERNEL_OK")
</pallas_src>

<mosaic_0001>
module attributes {stable_mosaic.version = 11 : i64} {
  func.func @_pos_enc_eval_kernel(%arg0: i32, %arg1: i32, %arg2: memref<2x256xf32, #tpu.memory_space<vmem>>, %arg3: memref<1x256xf32, #tpu.memory_space<vmem>>, %arg4: memref<2x256xf32, #tpu.memory_space<vmem>>) attributes {dimension_semantics = [#tpu.dimension_semantics<parallel>, #tpu.dimension_semantics<parallel>], iteration_bounds = array<i64: 1, 1>, scalar_prefetch = 0 : i64, scratch_operands = 0 : i64, tpu.core_type = #tpu.core_type<tc>, window_params = [{transform_indices = @transform_0, window_bounds = array<i64: 2, 256>}, {transform_indices = @transform_1, window_bounds = array<i64: 1, 256>}, {transform_indices = @transform_2, window_bounds = array<i64: 2, 256>}]} {
    %c0 = arith.constant 0 : index
    %c0_0 = arith.constant 0 : index
    %0 = vector.load %arg2[%c0, %c0_0] : memref<2x256xf32, #tpu.memory_space<vmem>>, vector<2x256xf32>
    %c0_1 = arith.constant 0 : index
    %c0_2 = arith.constant 0 : index
    %1 = vector.load %arg3[%c0_1, %c0_2] : memref<1x256xf32, #tpu.memory_space<vmem>>, vector<1x256xf32>
    %2 = vector.broadcast %1 : vector<1x256xf32> to vector<2x256xf32>
    %3 = arith.addf %0, %2 : vector<2x256xf32>
    %c0_3 = arith.constant 0 : index
    %c0_4 = arith.constant 0 : index
    %4 = vector.load %arg4[%c0_3, %c0_4] : memref<2x256xf32, #tpu.memory_space<vmem>>, vector<2x256xf32>
    tpu.vector_store %arg4[%c0_3, %c0_4], %3 {strides = array<i32>} : memref<2x256xf32, #tpu.memory_space<vmem>>, vector<2x256xf32>,
    return
  }
  func.func @transform_0(%arg0: i32, %arg1: i32) -> (i32, i32) {
    %c0_i32 = arith.constant 0 : i32
    return %arg1, %arg0 : i32, i32
  }
  func.func @transform_1(%arg0: i32, %arg1: i32) -> (i32, i32) {
    %c0_i32 = arith.constant 0 : i32
    %c0_i32_0 = arith.constant 0 : i32
    return %c0_i32, %arg0 : i32, i32
  }
  func.func @transform_2(%arg0: i32, %arg1: i32) -> (i32, i32) {
    %c0_i32 = arith.constant 0 : i32
    return %arg1, %arg0 : i32, i32
  }
}

</mosaic_0001>

<llo_original>
// kernel: tpu_custom_call.1
$region0: #{tpu_custom_call.1}
  #allocation0 [shape = 'u32[]', space=smem, size = 0x4, offset = 0x4, fixed_abs, tag = 'smem constant byte address 0x4 - core index']
  #allocation1 [shape = 'u32[144,128]{1,0:T(1,128)}', space=vmem, size = 0x12000, scoped, tag = 'internal scratch']
  %s0 = inlined_call_operand.hbm [shape: f32[2,256], index: 0, kind: input, shape index: {}]
  %s1 = inlined_call_operand.hbm [shape: f32[1,256], index: 1, kind: input, shape index: {}]
  %s2 = inlined_call_operand.hbm [shape: f32[2,256], index: 2, kind: output, shape index: {}]
  %s3 = sld [smem:[#allocation0]]
  $region26: #{tpu_custom_call.1} parent=0
    _
  %s5 = ssub.s32 1, %s3
  %s6 = scalar_select 0, %s5, %s3
  $region1: #{tpu_custom_call.1} parent=0
    #allocation2 [shape = 'u8[2048]{0}', space=vmem, size = 0x800, scoped, tag = 'input window, operand 0, single buffered']
    #allocation3 [shape = 's32[1]{0}', space=sflag, size = 0x4, scoped, tag = 'scoped memory for tpu_custom_call.1']
    #allocation4 [shape = 's32[1]{0}', space=sflag, size = 0x4, scoped, tag = 'scoped memory for tpu_custom_call.1']
    #allocation5 [shape = 'u8[1024]{0}', space=vmem, size = 0x400, scoped, tag = 'input window, operand 1, single buffered']
    #allocation6 [shape = 's32[1]{0}', space=sflag, size = 0x4, scoped, tag = 'scoped memory for tpu_custom_call.1']
    #allocation7 [shape = 'u8[2048]{0}', space=vmem, size = 0x800, scoped, tag = 'output window, operand 0, single buffered']
    %7 = vsyncpa [#allocation3], 0
    %8 = vsyncpa [#allocation6], 0
    %9 = vsyncpa [#allocation4], 0
    // Predicated region
    $region2: #{tpu_custom_call.1} parent=1 // pred_check
      _
    $region3: #{tpu_custom_call.1} parent=1 // pred_check_branch
      %11 = sbr.rel (0) target = $region5
    $region4: #{tpu_custom_call.1} parent=1 // pred_region
      %s13 = ssub.s32 64, 64
      %14 = vsyncadd [#allocation3], %s13
      %s16 = sshll.u32 [#allocation2], 4
      %s17 = int_to_ptr.vmem [resolvable:$true] %s16
      %19 = dma.hbm_to_vmem [thread:$0]  %s0, 64, %s17, [#allocation3]
    $region5: #{tpu_custom_call.1} parent=1 // pred_fallthru
      _
    // Predicated region
    $region6: #{tpu_custom_call.1} parent=1 // pred_check
      _
    $region7: #{tpu_custom_call.1} parent=1 // pred_check_branch
      %21 = sbr.rel (0) target = $region9
    $region8: #{tpu_custom_call.1} parent=1 // pred_region
      %s23 = ssub.s32 32, 32
      %24 = vsyncadd [#allocation6], %s23
      %s26 = sshll.u32 [#allocation5], 4
      %s27 = int_to_ptr.vmem [resolvable:$true] %s26
      %29 = dma.hbm_to_vmem [thread:$0]  %s1, 32, %s27, [#allocation6]
    $region9: #{tpu_custom_call.1} parent=1 // pred_fallthru
      _
    // Predicated region
    $region10: #{tpu_custom_call.1} parent=1 // pred_check
      _
    $region11: #{tpu_custom_call.1} parent=1 // pred_check_branch
      %31 = sbr.rel (0) target = $region13
    $region12: #{tpu_custom_call.1} parent=1 // pred_region
      %32 = dma.done [#allocation3], 64
    $region13: #{tpu_custom_call.1} parent=1 // pred_fallthru
      _
    // Predicated region
    $region14: #{tpu_custom_call.1} parent=1 // pred_check
      _
    $region15: #{tpu_custom_call.1} parent=1 // pred_check_branch
      %34 = sbr.rel (0) target = $region17
    $region16: #{tpu_custom_call.1} parent=1 // pred_region
      %35 = dma.done [#allocation6], 32
    $region17: #{tpu_custom_call.1} parent=1 // pred_fallthru
      _
    %v36 = vld [vmem:[#allocation2] sm:$0xf]
    %v37 = vld [vmem:[#allocation5] sm:$0x3]
    %v39 = vlaneseq
    %v40 = vshrl.u32 %v39, 7
    %v41 = vsub.s32 0, %v40
    %v42 = vrot.slane %v37, %v41
    %v43 = vlaneseq
    %v44 = vshrl.u32 %v43, 7
    %v45 = vsub.s32 1, %v44
    %v46 = vrot.slane %v37, %v45
    %v47 = vcombine.low %v42, %v46
    %v49 = vunpack.c.l.s4 1983009808
    %v50 = vunpack.c.0.s8 %v49
    %v51 = vlaneseq
    %v52 = vshrl.u32 %v51, 7
    %v53 = vsub.s32 %v50, %v52
    %v54 = vrot.slane %v47, %v53
    %v56 = vadd.f32 %v36, %v54
    %57 = vst [vmem:[#allocation7] sm:$0xf] %v56
    // Predicated region
    $region18: #{tpu_custom_call.1} parent=1 // pred_check
      _
    $region19: #{tpu_custom_call.1} parent=1 // pred_check_branch
      %59 = sbr.rel (0) target = $region21
    $region20: #{tpu_custom_call.1} parent=1 // pred_region
      %s61 = ssub.s32 64, 64
      %62 = vsyncadd [#allocation4], %s61
      %s64 = sshll.u32 [#allocation7], 4
      %s65 = int_to_ptr.vmem [resolvable:$true] %s64
      %67 = dma.vmem_to_hbm [thread:$0]  %s65, 64, %s2, [#allocation4]
    $region21: #{tpu_custom_call.1} parent=1 // pred_fallthru
      _
    // Predicated region
    $region22: #{tpu_custom_call.1} parent=1 // pred_check
      _
    $region23: #{tpu_custom_call.1} parent=1 // pred_check_branch
      %69 = sbr.rel (0) target = $region25
    $region24: #{tpu_custom_call.1} parent=1 // pred_region
      %70 = dma.done [#allocation4], 64
    $region25: #{tpu_custom_call.1} parent=1 // pred_fallthru
      _
    %71 = vsyncpa [#allocation3], 1
    %72 = vsyncpa [#allocation6], 1
    %73 = vsyncpa [#allocation4], 1

</llo_original>
